<compile_context>
chip_gen: v5e
topology: v5e:2x2
jax: 0.10.0
libtpu: 0.0.40
codegen_flags: <defaults>
</compile_context>

<pallas_src>
import functools

import numpy as np
import jax
import jax.numpy as jnp
from jax.experimental import pallas as pl
from jax.experimental.pallas import tpu as pltpu

_LANES = 128


def _ceil_to(x, m):
    return ((x + m - 1) // m) * m


# ----------------------------- Pallas kernel ------------------------------

def _make_eaurc_kernel(n, C, num_chunks):
    """EAURC kernel for static length `n`, chunk rows `C`, `num_chunks` steps.

    Per grid step the kernel sees one (C, 128) chunk of each group:
      group "conf": risks ordered by ascending confidence (zero padded)
      group "asc" : risks sorted ascending (optimal CSF, zero padded)
    """
    L = _LANES
    n_f = float(n)
    last_row_global = (n - 1) // L
    lr = last_row_global % C          # row (within the last chunk) of element n-1
    lc = (n - 1) % L                  # lane of element n-1

    def kernel(total_ref, tri_ref, lo_ref, rconf_ref, rasc_ref,
               scal_ref, sr_ref, sropt_ref,
               cc_ref, ca_ref, ssr_ref, ssro_ref):
        step = pl.program_id(0)

        @pl.when(step == 0)
        def _():
            cc_ref[...] = jnp.zeros_like(cc_ref)
            ca_ref[...] = jnp.zeros_like(ca_ref)
            ssr_ref[...] = jnp.zeros_like(ssr_ref)
            ssro_ref[...] = jnp.zeros_like(ssro_ref)

        tri = tri_ref[...]                                   # (128,128) incl. upper tri
        lo = lo_ref[...]                                     # (C,C) strict lower tri
        rc = rconf_ref[...]                                  # (C,128) by asc. confidence
        ra = rasc_ref[...]                                   # (C,128) sorted ascending

        # Within-row inclusive cumsum along lanes -- one MXU dot per group.
        w_c = jnp.dot(rc, tri, preferred_element_type=jnp.float32)
        w_a = jnp.dot(ra, tri, preferred_element_type=jnp.float32)

        # In-chunk cross-row carry: strict-lower scan of the per-row sums.
        # (C,C)x(C,1) dot: N=1, so total carry work stays linear in n.
        rt_c = jnp.sum(rc, axis=-1, keepdims=True)           # (C,1)
        rt_a = jnp.sum(ra, axis=-1, keepdims=True)
        carry_c = jnp.dot(lo, rt_c, preferred_element_type=jnp.float32)
        carry_a = jnp.dot(lo, rt_a, preferred_element_type=jnp.float32)

        # Global inclusive cumsum = within-row + in-chunk row carry + carry of
        # all previous chunks (VMEM scratch, accumulated along the grid).
        cum_c = w_c + carry_c + cc_ref[...]
        cum_a = w_a + carry_a + ca_ref[...]
        cc_ref[...] = cc_ref[...] + jnp.sum(rt_c, axis=0, keepdims=True)
        ca_ref[...] = ca_ref[...] + jnp.sum(rt_a, axis=0, keepdims=True)

        # Global element index in int32; positions >= n are zero padding.
        row = jax.lax.broadcasted_iota(jnp.int32, (C, L), 0)
        lane = jax.lax.broadcasted_iota(jnp.int32, (C, L), 1)
        kk = (row + step * C) * L + lane
        valid = kk < n

        total = total_ref[...]                               # (1,1) == sum(risks)

        # Optimal RC curve: sort(risks).cumsum() / arange(1, n+1)
        d_opt = jnp.where(valid, (kk + 1).astype(jnp.float32), 1.0)
        sr_opt = jnp.where(valid, cum_a / d_opt, 0.0)

        # Actual selective risks: SR[k] = (total - exclusive_cumsum[k]) / (n - k)
        excl = cum_c - rc
        d_sr = jnp.where(valid, (n - kk).astype(jnp.float32), 1.0)
        sr = jnp.where(valid, (total - excl) / d_sr, 0.0)

        sr_ref[...] = sr
        sropt_ref[...] = sr_opt

        ssr_ref[...] = ssr_ref[...] + jnp.sum(
            jnp.sum(sr, axis=-1, keepdims=True), axis=0, keepdims=True)
        ssro_ref[...] = ssro_ref[...] + jnp.sum(
            jnp.sum(sr_opt, axis=-1, keepdims=True), axis=0, keepdims=True)

        @pl.when(step == num_chunks - 1)
        def _():
            # The last valid element always lives in the last chunk.
            sr_last = sr[lr:lr + 1, lc:lc + 1]               # (1,1)
            sr_first = total / n_f                           # SR[0] = total / n
            aurc_opt = ssro_ref[...] / n_f
            # Trapezoid rule with uniform 1/n weights (distinct confidences):
            #   ret = (2*sum(SR) - SR[0] - SR[n-1]) / (2n)
            ret = (2.0 * ssr_ref[...] - sr_first - sr_last) / (2.0 * n_f)
            eaurc = ret - aurc_opt
            lane1 = jax.lax.broadcasted_iota(jnp.int32, (1, L), 1)
            # Lane-dense (1, 128) scalar slab: [eaurc, ret, aurc_opt, 0, ...].
            scal_ref[...] = (jnp.where(lane1 == 0, eaurc, 0.0)
                             + jnp.where(lane1 == 1, ret, 0.0)
                             + jnp.where(lane1 == 2, aurc_opt, 0.0))

    return kernel


def _eaurc_core(total, tri, lo, rconf, rasc, n, C, num_chunks):
    L = _LANES
    M_pad = C * num_chunks
    return pl.pallas_call(
        _make_eaurc_kernel(n, C, num_chunks),
        out_shape=(jax.ShapeDtypeStruct((1, L), jnp.float32),      # [eaurc, ret, aurc_opt,...]
                   jax.ShapeDtypeStruct((M_pad, L), jnp.float32),  # selective risks (actual)
                   jax.ShapeDtypeStruct((M_pad, L), jnp.float32)), # selective risks (optimal)
        grid_spec=pltpu.PrefetchScalarGridSpec(
            num_scalar_prefetch=0,
            grid=(num_chunks,),
            in_specs=[
                pl.BlockSpec((1, 1), lambda i: (0, 0)),            # total (constant)
                pl.BlockSpec((L, L), lambda i: (0, 0)),            # tri (constant)
                pl.BlockSpec((C, C), lambda i: (0, 0)),            # strict-lower (constant)
                pl.BlockSpec((C, L), lambda i: (i, 0)),            # risks by confidence
                pl.BlockSpec((C, L), lambda i: (i, 0)),            # risks sorted asc
            ],
            out_specs=(
                pl.BlockSpec((1, L), lambda i: (0, 0)),
                pl.BlockSpec((C, L), lambda i: (i, 0)),
                pl.BlockSpec((C, L), lambda i: (i, 0)),
            ),
            scratch_shapes=[
                pltpu.VMEM((1, 1), jnp.float32),   # cross-chunk carry (conf group)
                pltpu.VMEM((1, 1), jnp.float32),   # cross-chunk carry (sorted group)
                pltpu.VMEM((1, 1), jnp.float32),   # running sum of SR
                pltpu.VMEM((1, 1), jnp.float32),   # running sum of SR_opt
            ]),
        compiler_params=pltpu.CompilerParams(
            dimension_semantics=("arbitrary",)),   # sequential: carried cumsum
    )(total, tri, lo, rconf, rasc)


# ------------------------------ wrapper ------------------------------------

@functools.partial(jax.jit, static_argnames=("chunk_rows",))
def eaurc_forward(score, risks, chunk_rows=256):
    """Equivalent of EAURC(ret_curves=True).forward(score, risks)."""
    n = score.shape[0]
    L = _LANES
    M = _ceil_to(n, L) // L
    if M <= chunk_rows:
        C = _ceil_to(max(M, 1), 8)
        num_chunks = 1
    else:
        C = _ceil_to(chunk_rows, 8)
        num_chunks = _ceil_to(M, C) // C
    M_pad = C * num_chunks
    pad = M_pad * L - n

    score = score.astype(jnp.float32)
    risks = risks.astype(jnp.float32)

    # confids = 1 - (s-min)/(max-min) is strictly decreasing in score, so
    # ascending-confidence order == descending-score order (stable sort, same
    # tie order) -> the normalization never needs to be materialized.
    # TODO(synk): argsort / sort / gather have no Pallas TPU primitive; XLA glue.
    order = jnp.argsort(-score)
    r_by_conf = risks[order]
    r_asc = jnp.sort(risks)
    total = jnp.sum(risks).reshape(1, 1)

    rconf = jnp.pad(r_by_conf, (0, pad)).reshape(M_pad, L)
    rasc = jnp.pad(r_asc, (0, pad)).reshape(M_pad, L)

    tri = jnp.triu(jnp.ones((L, L), jnp.float32))            # inclusive lane scan
    lo = jnp.tril(jnp.ones((C, C), jnp.float32), k=-1)       # exclusive row scan

    scal, sr_b, sropt_b = _eaurc_core(total, tri, lo, rconf, rasc, n, C, num_chunks)
    eaurc_val = scal[0, 0]
    ret = scal[0, 1]
    sr = sr_b.reshape(M_pad * L)[:n]
    sr_opt = sropt_b.reshape(M_pad * L)[:n]

    # ret_curves=True outputs (flips / cumsum-of-constant / interp glue).
    risks_curve = jnp.flip(sr[:n - 1])                       # flip(SR[:-1])
    weights_curve = jnp.arange(1, n, dtype=jnp.float32) / n  # cumsum(flip(1/n))
    sel_risks_interp = jnp.interp(jnp.linspace(0.0, 1.0, n - 1),
                                  jnp.linspace(0.0, 1.0, n), sr_opt)
    return eaurc_val, ret, risks_curve, weights_curve, sel_risks_interp


# --------------------- pure-numpy reference (for check) --------------------

def _rc_curve_stats_np(confids, risks):
    coverages, selective_risks, weights = [], [], []
    n_samples = len(risks)
    idx_sorted = np.argsort(confids)
    coverage = n_samples
    error_sum = sum(risks)
    coverages.append(coverage / n_samples)
    selective_risks.append(error_sum / n_samples)
    tmp_weight = 0
    for i in range(0, len(idx_sorted) - 1):
        coverage -= 1
        error_sum -= risks[idx_sorted[i]]
        tmp_weight += 1
        if i == 0 or confids[idx_sorted[i]] != confids[idx_sorted[i - 1]]:
            coverages.append(coverage / n_samples)
            selective_risks.append(error_sum / (n_samples - 1 - i))
            weights.append(tmp_weight / n_samples)
            tmp_weight = 0
    if tmp_weight > 0:
        coverages.append(0)
        selective_risks.append(selective_risks[-1])
        weights.append(tmp_weight / n_samples)
    return coverages, selective_risks, weights


def _eaurc_numpy_ref(score, risks):
    n = len(risks)
    score = score.astype(np.float64)
    score = (score - score.min()) / (score.max() - score.min())
    confids = 1.0 - score
    risks = risks.astype(np.float64)
    selective_risks = np.sort(risks).cumsum() / np.arange(1, n + 1)
    aurc_opt = selective_risks.sum() / n
    _, srs, weights = _rc_curve_stats_np(confids, risks)
    ret = sum((srs[i] + srs[i + 1]) * 0.5 * weights[i] for i in range(len(weights)))
    risks_curve = np.flip(np.asarray(srs[:-1]))
    weights_curve = np.cumsum(np.flip(np.asarray(weights)))
    sel = np.interp(np.linspace(0, 1, len(weights_curve)),
                    np.linspace(0, 1, len(selective_risks)), selective_risks)
    return ret - aurc_opt, ret, risks_curve, weights_curve, sel


# --------------------------------- main ------------------------------------

if __name__ == "__main__":
    key = jax.random.PRNGKey(0)
    k1, k2, k3, k4 = jax.random.split(key, 4)

    # Case 1: n = 200 exercises lane padding (8 sublane rows), single-chunk grid.
    n = 200
    score = jax.random.uniform(k1, (n,), dtype=jnp.float32)   # per-sample uncertainty
    risks = jax.random.uniform(k2, (n,), dtype=jnp.float32)   # per-sample risk

    out = jax.block_until_ready(eaurc_forward(score, risks))
    ref = _eaurc_numpy_ref(np.asarray(score), np.asarray(risks))
    np.testing.assert_allclose(float(out[0]), ref[0], rtol=5e-4, atol=1e-4)
    np.testing.assert_allclose(float(out[1]), ref[1], rtol=5e-4, atol=1e-4)
    np.testing.assert_allclose(np.asarray(out[2]), ref[2], rtol=5e-4, atol=1e-4)
    np.testing.assert_allclose(np.asarray(out[3]), ref[3], rtol=5e-4, atol=1e-4)
    np.testing.assert_allclose(np.asarray(out[4]), ref[4], rtol=5e-4, atol=1e-4)

    # Case 2: force a multi-chunk grid (chunk_rows=8 -> 2 sequential chunks) to
    # exercise the carried cross-chunk cumsum.  Scores from a permuted linspace
    # guarantee the tie-free assumption holds.
    n2 = 2000
    score2 = jax.random.permutation(k3, jnp.linspace(0.0, 1.0, n2, dtype=jnp.float32))
    risks2 = jax.random.uniform(k4, (n2,), dtype=jnp.float32)

    out2 = jax.block_until_ready(eaurc_forward(score2, risks2, chunk_rows=8))
    ref2 = _eaurc_numpy_ref(np.asarray(score2), np.asarray(risks2))
    np.testing.assert_allclose(float(out2[0]), ref2[0], rtol=1e-3, atol=2e-4)
    np.testing.assert_allclose(float(out2[1]), ref2[1], rtol=1e-3, atol=2e-4)
    np.testing.assert_allclose(np.asarray(out2[2]), ref2[2], rtol=1e-3, atol=2e-4)
    np.testing.assert_allclose(np.asarray(out2[3]), ref2[3], rtol=1e-3, atol=2e-4)
    np.testing.assert_allclose(np.asarray(out2[4]), ref2[4], rtol=1e-3, atol=2e-4)

    print("KERNEL_OK")
</pallas_src>

<mosaic_0001>
module attributes {stable_mosaic.version = 11 : i64} {
  func.func @kernel(%arg0: i32, %arg1: memref<1x1xf32, #tpu.memory_space<vmem>>, %arg2: memref<128x128xf32, #tpu.memory_space<vmem>>, %arg3: memref<8x8xf32, #tpu.memory_space<vmem>>, %arg4: memref<8x128xf32, #tpu.memory_space<vmem>>, %arg5: memref<8x128xf32, #tpu.memory_space<vmem>>, %arg6: memref<1x128xf32, #tpu.memory_space<vmem>>, %arg7: memref<8x128xf32, #tpu.memory_space<vmem>>, %arg8: memref<8x128xf32, #tpu.memory_space<vmem>>, %arg9: memref<1x1xf32, #tpu.memory_space<vmem>>, %arg10: memref<1x1xf32, #tpu.memory_space<vmem>>, %arg11: memref<1x1xf32, #tpu.memory_space<vmem>>, %arg12: memref<1x1xf32, #tpu.memory_space<vmem>>) attributes {dimension_semantics = [#tpu.dimension_semantics<arbitrary>], iteration_bounds = array<i64: 1>, scalar_prefetch = 0 : i64, scratch_operands = 4 : i64, tpu.core_type = #tpu.core_type<tc>, window_params = [{pipeline_mode = #tpu.pipeline_mode<synchronous>, transform_indices = @transform_0, window_bounds = array<i64: 1, 1>}, {pipeline_mode = #tpu.pipeline_mode<synchronous>, transform_indices = @transform_1, window_bounds = array<i64: 128, 128>}, {pipeline_mode = #tpu.pipeline_mode<synchronous>, transform_indices = @transform_2, window_bounds = array<i64: 8, 8>}, {transform_indices = @transform_3, window_bounds = array<i64: 8, 128>}, {transform_indices = @transform_4, window_bounds = array<i64: 8, 128>}, {pipeline_mode = #tpu.pipeline_mode<synchronous>, transform_indices = @transform_5, window_bounds = array<i64: 1, 128>}, {transform_indices = @transform_6, window_bounds = array<i64: 8, 128>}, {transform_indices = @transform_7, window_bounds = array<i64: 8, 128>}]} {
    %c0_i32 = arith.constant 0 : i32
    %0 = arith.cmpi eq, %arg0, %c0_i32 : i32
    %1 = arith.extui %0 : i1 to i32
    %c0_i32_0 = arith.constant 0 : i32
    %2 = arith.cmpi ne, %1, %c0_i32_0 : i32
    scf.if %2 {
      %cst_52 = arith.constant 0.000000e+00 : f32
      %84 = vector.broadcast %cst_52 : f32 to vector<1x1xf32>
      %c0_53 = arith.constant 0 : index
      %c0_54 = arith.constant 0 : index
      %85 = vector.load %arg9[%c0_53, %c0_54] : memref<1x1xf32, #tpu.memory_space<vmem>>, vector<1x1xf32>
      tpu.vector_store %arg9[%c0_53, %c0_54], %84 {strides = array<i32>} : memref<1x1xf32, #tpu.memory_space<vmem>>, vector<1x1xf32>,
      %cst_55 = arith.constant 0.000000e+00 : f32
      %86 = vector.broadcast %cst_55 : f32 to vector<1x1xf32>
      %c0_56 = arith.constant 0 : index
      %c0_57 = arith.constant 0 : index
      %87 = vector.load %arg10[%c0_56, %c0_57] : memref<1x1xf32, #tpu.memory_space<vmem>>, vector<1x1xf32>
      tpu.vector_store %arg10[%c0_56, %c0_57], %86 {strides = array<i32>} : memref<1x1xf32, #tpu.memory_space<vmem>>, vector<1x1xf32>,
      %cst_58 = arith.constant 0.000000e+00 : f32
      %88 = vector.broadcast %cst_58 : f32 to vector<1x1xf32>
      %c0_59 = arith.constant 0 : index
      %c0_60 = arith.constant 0 : index
      %89 = vector.load %arg11[%c0_59, %c0_60] : memref<1x1xf32, #tpu.memory_space<vmem>>, vector<1x1xf32>
      tpu.vector_store %arg11[%c0_59, %c0_60], %88 {strides = array<i32>} : memref<1x1xf32, #tpu.memory_space<vmem>>, vector<1x1xf32>,
      %cst_61 = arith.constant 0.000000e+00 : f32
      %90 = vector.broadcast %cst_61 : f32 to vector<1x1xf32>
      %c0_62 = arith.constant 0 : index
      %c0_63 = arith.constant 0 : index
      %91 = vector.load %arg12[%c0_62, %c0_63] : memref<1x1xf32, #tpu.memory_space<vmem>>, vector<1x1xf32>
      tpu.vector_store %arg12[%c0_62, %c0_63], %90 {strides = array<i32>} : memref<1x1xf32, #tpu.memory_space<vmem>>, vector<1x1xf32>,
    } else {
    }
    %c0 = arith.constant 0 : index
    %c0_1 = arith.constant 0 : index
    %3 = vector.load %arg2[%c0, %c0_1] : memref<128x128xf32, #tpu.memory_space<vmem>>, vector<128x128xf32>
    %c0_2 = arith.constant 0 : index
    %c0_3 = arith.constant 0 : index
    %4 = vector.load %arg3[%c0_2, %c0_3] : memref<8x8xf32, #tpu.memory_space<vmem>>, vector<8x8xf32>
    %c0_4 = arith.constant 0 : index
    %c0_5 = arith.constant 0 : index
    %5 = vector.load %arg4[%c0_4, %c0_5] : memref<8x128xf32, #tpu.memory_space<vmem>>, vector<8x128xf32>
    %c0_6 = arith.constant 0 : index
    %c0_7 = arith.constant 0 : index
    %6 = vector.load %arg5[%c0_6, %c0_7] : memref<8x128xf32, #tpu.memory_space<vmem>>, vector<8x128xf32>
    %cst = arith.constant dense<0.000000e+00> : vector<8x128xf32>
    %7 = tpu.matmul %5, %3, %cst {dimension_numbers = #tpu.dot_dimension_numbers<[1], [0], [0], [1], [0, 0, 1, 1], [], []>} : vector<8x128xf32>, vector<128x128xf32>, vector<8x128xf32> -> vector<8x128xf32>
    %cst_8 = arith.constant dense<0.000000e+00> : vector<8x128xf32>
    %8 = tpu.matmul %6, %3, %cst_8 {dimension_numbers = #tpu.dot_dimension_numbers<[1], [0], [0], [1], [0, 0, 1, 1], [], []>} : vector<8x128xf32>, vector<128x128xf32>, vector<8x128xf32> -> vector<8x128xf32>
    %cst_9 = arith.constant dense<0.000000e+00> : vector<8xf32>
    %9 = vector.multi_reduction <add>, %5, %cst_9 [1] : vector<8x128xf32> to vector<8xf32>
    %10 = vector.shape_cast %9 : vector<8xf32> to vector<8x1xf32>
    %cst_10 = arith.constant dense<0.000000e+00> : vector<8xf32>
    %11 = vector.multi_reduction <add>, %6, %cst_10 [1] : vector<8x128xf32> to vector<8xf32>
    %12 = vector.shape_cast %11 : vector<8xf32> to vector<8x1xf32>
    %cst_11 = arith.constant dense<0.000000e+00> : vector<8x1xf32>
    %13 = tpu.matmul %4, %10, %cst_11 {dimension_numbers = #tpu.dot_dimension_numbers<[1], [0], [0], [1], [0, 0, 1, 1], [], []>} : vector<8x8xf32>, vector<8x1xf32>, vector<8x1xf32> -> vector<8x1xf32>
    %cst_12 = arith.constant dense<0.000000e+00> : vector<8x1xf32>
    %14 = tpu.matmul %4, %12, %cst_12 {dimension_numbers = #tpu.dot_dimension_numbers<[1], [0], [0], [1], [0, 0, 1, 1], [], []>} : vector<8x8xf32>, vector<8x1xf32>, vector<8x1xf32> -> vector<8x1xf32>
    %15 = vector.broadcast %13 : vector<8x1xf32> to vector<8x128xf32>
    %16 = arith.addf %7, %15 : vector<8x128xf32>
    %c0_13 = arith.constant 0 : index
    %c0_14 = arith.constant 0 : index
    %17 = vector.load %arg9[%c0_13, %c0_14] : memref<1x1xf32, #tpu.memory_space<vmem>>, vector<1x1xf32>
    %18 = vector.broadcast %17 : vector<1x1xf32> to vector<8x128xf32>
    %19 = arith.addf %16, %18 : vector<8x128xf32>
    %20 = vector.broadcast %14 : vector<8x1xf32> to vector<8x128xf32>
    %21 = arith.addf %8, %20 : vector<8x128xf32>
    %c0_15 = arith.constant 0 : index
    %c0_16 = arith.constant 0 : index
    %22 = vector.load %arg10[%c0_15, %c0_16] : memref<1x1xf32, #tpu.memory_space<vmem>>, vector<1x1xf32>
    %23 = vector.broadcast %22 : vector<1x1xf32> to vector<8x128xf32>
    %24 = arith.addf %21, %23 : vector<8x128xf32>
    %c0_17 = arith.constant 0 : index
    %c0_18 = arith.constant 0 : index
    %25 = vector.load %arg9[%c0_17, %c0_18] : memref<1x1xf32, #tpu.memory_space<vmem>>, vector<1x1xf32>
    %cst_19 = arith.constant dense<0.000000e+00> : vector<1xf32>
    %26 = vector.multi_reduction <add>, %10, %cst_19 [0] : vector<8x1xf32> to vector<1xf32>
    %27 = vector.shape_cast %26 : vector<1xf32> to vector<1x1xf32>
    %28 = arith.addf %25, %27 : vector<1x1xf32>
    %c0_20 = arith.constant 0 : index
    %c0_21 = arith.constant 0 : index
    %29 = vector.load %arg9[%c0_20, %c0_21] : memref<1x1xf32, #tpu.memory_space<vmem>>, vector<1x1xf32>
    tpu.vector_store %arg9[%c0_20, %c0_21], %28 {strides = array<i32>} : memref<1x1xf32, #tpu.memory_space<vmem>>, vector<1x1xf32>,
    %c0_22 = arith.constant 0 : index
    %c0_23 = arith.constant 0 : index
    %30 = vector.load %arg10[%c0_22, %c0_23] : memref<1x1xf32, #tpu.memory_space<vmem>>, vector<1x1xf32>
    %cst_24 = arith.constant dense<0.000000e+00> : vector<1xf32>
    %31 = vector.multi_reduction <add>, %12, %cst_24 [0] : vector<8x1xf32> to vector<1xf32>
    %32 = vector.shape_cast %31 : vector<1xf32> to vector<1x1xf32>
    %33 = arith.addf %30, %32 : vector<1x1xf32>
    %c0_25 = arith.constant 0 : index
    %c0_26 = arith.constant 0 : index
    %34 = vector.load %arg10[%c0_25, %c0_26] : memref<1x1xf32, #tpu.memory_space<vmem>>, vector<1x1xf32>
    tpu.vector_store %arg10[%c0_25, %c0_26], %33 {strides = array<i32>} : memref<1x1xf32, #tpu.memory_space<vmem>>, vector<1x1xf32>,
    %35 = tpu.iota {dimensions = array<i32: 0>} : vector<8x128xi32>
    %36 = tpu.iota {dimensions = array<i32: 1>} : vector<8x128xi32>
    %c8_i32 = arith.constant 8 : i32
    %37 = arith.muli %arg0, %c8_i32 : i32
    %38 = vector.broadcast %37 : i32 to vector<8x128xi32>
    %39 = arith.addi %35, %38 : vector<8x128xi32>
    %c128_i32 = arith.constant 128 : i32
    %40 = vector.broadcast %c128_i32 : i32 to vector<8x128xi32>
    %41 = arith.muli %39, %40 : vector<8x128xi32>
    %42 = arith.addi %41, %36 : vector<8x128xi32>
    %c200_i32 = arith.constant 200 : i32
    %43 = vector.broadcast %c200_i32 : i32 to vector<8x128xi32>
    %44 = arith.cmpi slt, %42, %43 : vector<8x128xi32>
    %c0_27 = arith.constant 0 : index
    %c0_28 = arith.constant 0 : index
    %45 = vector.load %arg1[%c0_27, %c0_28] : memref<1x1xf32, #tpu.memory_space<vmem>>, vector<1x1xf32>
    %c1_i32 = arith.constant 1 : i32
    %46 = vector.broadcast %c1_i32 : i32 to vector<8x128xi32>
    %47 = arith.addi %42, %46 : vector<8x128xi32>
    %48 = arith.sitofp %47 : vector<8x128xi32> to vector<8x128xf32>
    %cst_29 = arith.constant 1.000000e+00 : f32
    %49 = vector.broadcast %cst_29 : f32 to vector<8x128xf32>
    %50 = arith.select %44, %48, %49 : vector<8x128xi1>, vector<8x128xf32>
    %51 = arith.divf %24, %50 : vector<8x128xf32>
    %cst_30 = arith.constant 0.000000e+00 : f32
    %52 = vector.broadcast %cst_30 : f32 to vector<8x128xf32>
    %53 = arith.select %44, %51, %52 : vector<8x128xi1>, vector<8x128xf32>
    %54 = arith.subf %19, %5 : vector<8x128xf32>
    %c200_i32_31 = arith.constant 200 : i32
    %55 = vector.broadcast %c200_i32_31 : i32 to vector<8x128xi32>
    %56 = arith.subi %55, %42 : vector<8x128xi32>
    %57 = arith.sitofp %56 : vector<8x128xi32> to vector<8x128xf32>
    %cst_32 = arith.constant 1.000000e+00 : f32
    %58 = vector.broadcast %cst_32 : f32 to vector<8x128xf32>
    %59 = arith.select %44, %57, %58 : vector<8x128xi1>, vector<8x128xf32>
    %60 = vector.broadcast %45 : vector<1x1xf32> to vector<8x128xf32>
    %61 = arith.subf %60, %54 : vector<8x128xf32>
    %62 = arith.divf %61, %59 : vector<8x128xf32>
    %cst_33 = arith.constant 0.000000e+00 : f32
    %63 = vector.broadcast %cst_33 : f32 to vector<8x128xf32>
    %64 = arith.select %44, %62, %63 : vector<8x128xi1>, vector<8x128xf32>
    %c0_34 = arith.constant 0 : index
    %c0_35 = arith.constant 0 : index
    %65 = vector.load %arg7[%c0_34, %c0_35] : memref<8x128xf32, #tpu.memory_space<vmem>>, vector<8x128xf32>
    tpu.vector_store %arg7[%c0_34, %c0_35], %64 {strides = array<i32>} : memref<8x128xf32, #tpu.memory_space<vmem>>, vector<8x128xf32>,
    %c0_36 = arith.constant 0 : index
    %c0_37 = arith.constant 0 : index
    %66 = vector.load %arg8[%c0_36, %c0_37] : memref<8x128xf32, #tpu.memory_space<vmem>>, vector<8x128xf32>
    tpu.vector_store %arg8[%c0_36, %c0_37], %53 {strides = array<i32>} : memref<8x128xf32, #tpu.memory_space<vmem>>, vector<8x128xf32>,
    %c0_38 = arith.constant 0 : index
    %c0_39 = arith.constant 0 : index
    %67 = vector.load %arg11[%c0_38, %c0_39] : memref<1x1xf32, #tpu.memory_space<vmem>>, vector<1x1xf32>
    %cst_40 = arith.constant dense<0.000000e+00> : vector<8xf32>
    %68 = vector.multi_reduction <add>, %64, %cst_40 [1] : vector<8x128xf32> to vector<8xf32>
    %69 = vector.shape_cast %68 : vector<8xf32> to vector<8x1xf32>
    %cst_41 = arith.constant dense<0.000000e+00> : vector<1xf32>
    %70 = vector.multi_reduction <add>, %69, %cst_41 [0] : vector<8x1xf32> to vector<1xf32>
    %71 = vector.shape_cast %70 : vector<1xf32> to vector<1x1xf32>
    %72 = arith.addf %67, %71 : vector<1x1xf32>
    %c0_42 = arith.constant 0 : index
    %c0_43 = arith.constant 0 : index
    %73 = vector.load %arg11[%c0_42, %c0_43] : memref<1x1xf32, #tpu.memory_space<vmem>>, vector<1x1xf32>
    tpu.vector_store %arg11[%c0_42, %c0_43], %72 {strides = array<i32>} : memref<1x1xf32, #tpu.memory_space<vmem>>, vector<1x1xf32>,
    %c0_44 = arith.constant 0 : index
    %c0_45 = arith.constant 0 : index
    %74 = vector.load %arg12[%c0_44, %c0_45] : memref<1x1xf32, #tpu.memory_space<vmem>>, vector<1x1xf32>
    %cst_46 = arith.constant dense<0.000000e+00> : vector<8xf32>
    %75 = vector.multi_reduction <add>, %53, %cst_46 [1] : vector<8x128xf32> to vector<8xf32>
    %76 = vector.shape_cast %75 : vector<8xf32> to vector<8x1xf32>
    %cst_47 = arith.constant dense<0.000000e+00> : vector<1xf32>
    %77 = vector.multi_reduction <add>, %76, %cst_47 [0] : vector<8x1xf32> to vector<1xf32>
    %78 = vector.shape_cast %77 : vector<1xf32> to vector<1x1xf32>
    %79 = arith.addf %74, %78 : vector<1x1xf32>
    %c0_48 = arith.constant 0 : index
    %c0_49 = arith.constant 0 : index
    %80 = vector.load %arg12[%c0_48, %c0_49] : memref<1x1xf32, #tpu.memory_space<vmem>>, vector<1x1xf32>
    tpu.vector_store %arg12[%c0_48, %c0_49], %79 {strides = array<i32>} : memref<1x1xf32, #tpu.memory_space<vmem>>, vector<1x1xf32>,
    %c0_i32_50 = arith.constant 0 : i32
    %81 = arith.cmpi eq, %arg0, %c0_i32_50 : i32
    %82 = arith.extui %81 : i1 to i32
    %c0_i32_51 = arith.constant 0 : i32
    %83 = arith.cmpi ne, %82, %c0_i32_51 : i32
    scf.if %83 {
      %84 = vector.extract_strided_slice %64 {offsets = [1, 71], sizes = [1, 1], strides = [1, 1]} : vector<8x128xf32> to vector<1x1xf32>
      %cst_52 = arith.constant 2.000000e+02 : f32
      %85 = vector.broadcast %cst_52 : f32 to vector<1x1xf32>
      %86 = arith.divf %45, %85 : vector<1x1xf32>
      %c0_53 = arith.constant 0 : index
      %c0_54 = arith.constant 0 : index
      %87 = vector.load %arg12[%c0_53, %c0_54] : memref<1x1xf32, #tpu.memory_space<vmem>>, vector<1x1xf32>
      %cst_55 = arith.constant 2.000000e+02 : f32
      %88 = vector.broadcast %cst_55 : f32 to vector<1x1xf32>
      %89 = arith.divf %87, %88 : vector<1x1xf32>
      %c0_56 = arith.constant 0 : index
      %c0_57 = arith.constant 0 : index
      %90 = vector.load %arg11[%c0_56, %c0_57] : memref<1x1xf32, #tpu.memory_space<vmem>>, vector<1x1xf32>
      %cst_58 = arith.constant 2.000000e+00 : f32
      %91 = vector.broadcast %cst_58 : f32 to vector<1x1xf32>
      %92 = arith.mulf %91, %90 : vector<1x1xf32>
      %93 = arith.subf %92, %86 : vector<1x1xf32>
      %94 = arith.subf %93, %84 : vector<1x1xf32>
      %cst_59 = arith.constant 4.000000e+02 : f32
      %95 = vector.broadcast %cst_59 : f32 to vector<1x1xf32>
      %96 = arith.divf %94, %95 : vector<1x1xf32>
      %97 = arith.subf %96, %89 : vector<1x1xf32>
      %98 = tpu.iota {dimensions = array<i32: 1>} : vector<1x128xi32>
      %c0_i32_60 = arith.constant 0 : i32
      %99 = vector.broadcast %c0_i32_60 : i32 to vector<1x128xi32>
      %100 = arith.cmpi eq, %98, %99 : vector<1x128xi32>
      %cst_61 = arith.constant 0.000000e+00 : f32
      %101 = vector.shape_cast %97 : vector<1x1xf32> to vector<1x1xf32>
      %102 = vector.broadcast %101 : vector<1x1xf32> to vector<1x128xf32>
      %103 = vector.broadcast %cst_61 : f32 to vector<1x128xf32>
      %104 = arith.select %100, %102, %103 : vector<1x128xi1>, vector<1x128xf32>
      %c1_i32_62 = arith.constant 1 : i32
      %105 = vector.broadcast %c1_i32_62 : i32 to vector<1x128xi32>
      %106 = arith.cmpi eq, %98, %105 : vector<1x128xi32>
      %cst_63 = arith.constant 0.000000e+00 : f32
      %107 = vector.shape_cast %96 : vector<1x1xf32> to vector<1x1xf32>
      %108 = vector.broadcast %107 : vector<1x1xf32> to vector<1x128xf32>
      %109 = vector.broadcast %cst_63 : f32 to vector<1x128xf32>
      %110 = arith.select %106, %108, %109 : vector<1x128xi1>, vector<1x128xf32>
      %111 = arith.addf %104, %110 : vector<1x128xf32>
      %c2_i32 = arith.constant 2 : i32
      %112 = vector.broadcast %c2_i32 : i32 to vector<1x128xi32>
      %113 = arith.cmpi eq, %98, %112 : vector<1x128xi32>
      %cst_64 = arith.constant 0.000000e+00 : f32
      %114 = vector.shape_cast %89 : vector<1x1xf32> to vector<1x1xf32>
      %115 = vector.broadcast %114 : vector<1x1xf32> to vector<1x128xf32>
      %116 = vector.broadcast %cst_64 : f32 to vector<1x128xf32>
      %117 = arith.select %113, %115, %116 : vector<1x128xi1>, vector<1x128xf32>
      %118 = arith.addf %111, %117 : vector<1x128xf32>
      %c0_65 = arith.constant 0 : index
      %c0_66 = arith.constant 0 : index
      %119 = vector.load %arg6[%c0_65, %c0_66] : memref<1x128xf32, #tpu.memory_space<vmem>>, vector<1x128xf32>
      tpu.vector_store %arg6[%c0_65, %c0_66], %118 {strides = array<i32>} : memref<1x128xf32, #tpu.memory_space<vmem>>, vector<1x128xf32>,
    } else {
    }
    return
  }
  func.func @transform_0(%arg0: i32) -> (i32, i32) {
    %c0_i32 = arith.constant 0 : i32
    %c0_i32_0 = arith.constant 0 : i32
    %c0_i32_1 = arith.constant 0 : i32
    return %c0_i32, %c0_i32_0 : i32, i32
  }
  func.func @transform_1(%arg0: i32) -> (i32, i32) {
    %c0_i32 = arith.constant 0 : i32
    %c0_i32_0 = arith.constant 0 : i32
    %c0_i32_1 = arith.constant 0 : i32
    return %c0_i32, %c0_i32_0 : i32, i32
  }
  func.func @transform_2(%arg0: i32) -> (i32, i32) {
    %c0_i32 = arith.constant 0 : i32
    %c0_i32_0 = arith.constant 0 : i32
    %c0_i32_1 = arith.constant 0 : i32
    return %c0_i32, %c0_i32_0 : i32, i32
  }
  func.func @transform_3(%arg0: i32) -> (i32, i32) {
    %c0_i32 = arith.constant 0 : i32
    %c0_i32_0 = arith.constant 0 : i32
    return %arg0, %c0_i32 : i32, i32
  }
  func.func @transform_4(%arg0: i32) -> (i32, i32) {
    %c0_i32 = arith.constant 0 : i32
    %c0_i32_0 = arith.constant 0 : i32
    return %arg0, %c0_i32 : i32, i32
  }
  func.func @transform_5(%arg0: i32) -> (i32, i32) {
    %c0_i32 = arith.constant 0 : i32
    %c0_i32_0 = arith.constant 0 : i32
    %c0_i32_1 = arith.constant 0 : i32
    return %c0_i32, %c0_i32_0 : i32, i32
  }
  func.func @transform_6(%arg0: i32) -> (i32, i32) {
    %c0_i32 = arith.constant 0 : i32
    %c0_i32_0 = arith.constant 0 : i32
    return %arg0, %c0_i32 : i32, i32
  }
  func.func @transform_7(%arg0: i32) -> (i32, i32) {
    %c0_i32 = arith.constant 0 : i32
    %c0_i32_0 = arith.constant 0 : i32
    return %arg0, %c0_i32 : i32, i32
  }
}

</mosaic_0001>

<llo_original>
// kernel: neg.1
$region0: #{neg.1}
  #allocation0 [shape = 's32[1]{0}', space=sflag, size = 0x4, scoped, tag = 'scoped memory for neg.1']
  %s0 = inlined_call_operand.vmem [shape: f32[200], index: 0, kind: input, shape index: {}]
  %s1 = inlined_call_operand.vmem [shape: f32[200], index: 1, kind: output, shape index: {}]
  %v2 = vld [vmem:[%s0] sm:$0x3]
  %3 = xla_tuple %v2
  %4 = xla_tuple %3
  %v5 = vxor.u32 %v2, 2147483648
  %6 = xla_tuple %v5
  %7 = vst [vmem:[%s1] sm:$0x3] %v5

// kernel: eaurc_forward.1
$region0: #{eaurc_forward.1}
  #allocation0 [shape = 'u32[]', space=smem, size = 0x4, offset = 0x4, fixed_abs, tag = 'smem constant byte address 0x4 - core index']
  #allocation1 [shape = 'u32[72,128]{1,0:T(1,128)}', space=vmem, size = 0x9000, scoped, tag = 'internal scratch']
  #allocation2 [shape = 'f32[1,1]{1,0:T(1,128)}', space=vmem, size = 0x200, scoped, tag = 'scratch operand']
  #allocation3 [shape = 'f32[1,1]{1,0:T(1,128)}', space=vmem, size = 0x200, scoped, tag = 'scratch operand']
  #allocation4 [shape = 'f32[1,1]{1,0:T(1,128)}', space=vmem, size = 0x200, scoped, tag = 'scratch operand']
  #allocation5 [shape = 'f32[1,1]{1,0:T(1,128)}', space=vmem, size = 0x200, scoped, tag = 'scratch operand']
  #allocation6 [shape = 'f32[1,1]{1,0:T(1,128)S(1)}', space=vmem, size = 0x200, scoped, tag = 'scoped memory for eaurc_forward.1']
  %s0 = inlined_call_operand.<no memory space> [shape: f32[1,1], index: 0, kind: input, shape index: {}]
  %s1 = inlined_call_operand.vmem [shape: f32[128,128], index: 1, kind: input, shape index: {}]
  %s2 = inlined_call_operand.vmem [shape: f32[8,8], index: 2, kind: input, shape index: {}]
  %s3 = inlined_call_operand.vmem [shape: f32[8,128], index: 3, kind: input, shape index: {}]
  %s4 = inlined_call_operand.vmem [shape: f32[8,128], index: 4, kind: input, shape index: {}]
  %s5 = inlined_call_operand.vmem [shape: f32[1,128], index: 5, kind: output, shape index: {0}]
  %s6 = inlined_call_operand.vmem [shape: f32[8,128], index: 6, kind: output, shape index: {1}]
  %s7 = inlined_call_operand.vmem [shape: f32[8,128], index: 7, kind: output, shape index: {2}]
  %8 = xla_tuple %s5, %s6, %s7
  %s9 = sld [smem:[#allocation0]]
  $region54: #{eaurc_forward.1} parent=0
    _
  %s11 = ssub.s32 1, %s9
  %s12 = scalar_select 0, %s11, %s9
  %v13 = vstv %s0
  %14 = vst [vmem:[#allocation6] sm:$0x1] %v13
  // Predicated region
  $region2: #{eaurc_forward.1} parent=0 // pred_check
    _
  $region3: #{eaurc_forward.1} parent=0 // pred_check_branch
    %16 = sbr.rel (0) target = $region5
  $region4: #{eaurc_forward.1} parent=0 // pred_region
    _
  $region5: #{eaurc_forward.1} parent=0 // pred_fallthru
    _
  // Predicated region
  $region6: #{eaurc_forward.1} parent=0 // pred_check
    _
  $region7: #{eaurc_forward.1} parent=0 // pred_check_branch
    %18 = sbr.rel (0) target = $region9
  $region8: #{eaurc_forward.1} parent=0 // pred_region
    _
  $region9: #{eaurc_forward.1} parent=0 // pred_fallthru
    _
  // Predicated region
  $region10: #{eaurc_forward.1} parent=0 // pred_check
    _
  $region11: #{eaurc_forward.1} parent=0 // pred_check_branch
    %20 = sbr.rel (0) target = $region13
  $region12: #{eaurc_forward.1} parent=0 // pred_region
    _
  $region13: #{eaurc_forward.1} parent=0 // pred_fallthru
    _
  // Predicated region
  $region14: #{eaurc_forward.1} parent=0 // pred_check
    _
  $region15: #{eaurc_forward.1} parent=0 // pred_check_branch
    %22 = sbr.rel (0) target = $region17
  $region16: #{eaurc_forward.1} parent=0 // pred_region
    _
  $region17: #{eaurc_forward.1} parent=0 // pred_fallthru
    _
  // Predicated region
  $region18: #{eaurc_forward.1} parent=0 // pred_check
    _
  $region19: #{eaurc_forward.1} parent=0 // pred_check_branch
    %24 = sbr.rel (0) target = $region21
  $region20: #{eaurc_forward.1} parent=0 // pred_region
    _
  $region21: #{eaurc_forward.1} parent=0 // pred_fallthru
    _
  %p25 = scmp.eq.s32.totalorder 0, 0
  // Predicated region
  $region22: #{eaurc_forward.1} parent=0 // pred_check
    %p26 = pneg %p25
  $region23: #{eaurc_forward.1} parent=0 // pred_check_branch
    %28 = sbr.rel (%p26) target = $region25
  $region24: #{eaurc_forward.1} parent=0 // pred_region
    %vm29 = vcmask 0
    %30 = vst.msk [vmem:[#allocation2] sm:$0x1] %vm29, 0.0
    %31 = vst.msk [vmem:[#allocation3] sm:$0x1] %vm29, 0.0
    %32 = vst.msk [vmem:[#allocation4] sm:$0x1] %vm29, 0.0
    %33 = vst.msk [vmem:[#allocation5] sm:$0x1] %vm29, 0.0
  $region25: #{eaurc_forward.1} parent=0 // pred_fallthru
    _
  %v34 = vld [vmem:[%s1] sm:$0xff]
  %v35 = vld [vmem:[%s1 + $0x8] sm:$0xff]
  %v36 = vld [vmem:[%s1 + $0x10] sm:$0xff]
  %v37 = vld [vmem:[%s1 + $0x18] sm:$0xff]
  %v38 = vld [vmem:[%s1 + $0x20] sm:$0xff]
  %v39 = vld [vmem:[%s1 + $0x28] sm:$0xff]
  %v40 = vld [vmem:[%s1 + $0x30] sm:$0xff]
  %v41 = vld [vmem:[%s1 + $0x38] sm:$0xff]
  %v42 = vld [vmem:[%s1 + $0x40] sm:$0xff]
  %v43 = vld [vmem:[%s1 + $0x48] sm:$0xff]
  %v44 = vld [vmem:[%s1 + $0x50] sm:$0xff]
  %v45 = vld [vmem:[%s1 + $0x58] sm:$0xff]
  %v46 = vld [vmem:[%s1 + $0x60] sm:$0xff]
  %v47 = vld [vmem:[%s1 + $0x68] sm:$0xff]
  %v48 = vld [vmem:[%s1 + $0x70] sm:$0xff]
  %v49 = vld [vmem:[%s1 + $0x78] sm:$0xff]
  %v50 = vld [vmem:[%s2] sm:$0xff]
  %v51 = vld [vmem:[%s3] sm:$0xff]
  %v52 = vld [vmem:[%s4] sm:$0xff]
  %53 = vadd.xlane.f32.xlu0 %v51
  %v54 = vpop.xlane.xlu0 %53
  %55 = vadd.xlane.f32.xlu0 %v52
  %v56 = vpop.xlane.xlu0 %55
  %vm57 = vcmask 64512
  %v59 = vsel %vm57, %v50, 0
  %61 = vmatpush.msra.mxu0 0.0
  %62 = vmatpush.msra.mxu0 0.0
  %63 = vmatpush.msra.mxu0 0.0
  %64 = vmatpush.msra.mxu0 0.0
  %65 = vmatpush.msra.mxu0 0.0
  %66 = vmatpush.msra.mxu0 0.0
  %67 = vmatpush.msra.mxu0 0.0
  %68 = vmatpush.msra.mxu0 0.0
  %69 = vmatpush.msra.mxu0 0.0
  %70 = vmatpush.msra.mxu0 0.0
  %71 = vmatpush.msra.mxu0 0.0
  %72 = vmatpush.msra.mxu0 0.0
  %73 = vmatpush.msra.mxu0 0.0
  %74 = vmatpush.msra.mxu0 0.0
  %75 = vmatpush.msra.mxu0 0.0
  %76 = vmatpush.msra.mxu0 %v54
  %77 = vmatmul.f32.gmra.mxu0 %v59
  %v78 = vpop.f32.mrf.mxu0
  %v79 = vadd.f32 0.0, %v78
  %80 = vdwg.mxu0
  %81 = vmatpush.msra.mxu0 0.0
  %82 = vmatpush.msra.mxu0 0.0
  %83 = vmatpush.msra.mxu0 0.0
  %84 = vmatpush.msra.mxu0 0.0
  %85 = vmatpush.msra.mxu0 0.0
  %86 = vmatpush.msra.mxu0 0.0
  %87 = vmatpush.msra.mxu0 0.0
  %88 = vmatpush.msra.mxu0 0.0
  %89 = vmatpush.msra.mxu0 0.0
  %90 = vmatpush.msra.mxu0 0.0
  %91 = vmatpush.msra.mxu0 0.0
  %92 = vmatpush.msra.mxu0 0.0
  %93 = vmatpush.msra.mxu0 0.0
  %94 = vmatpush.msra.mxu0 0.0
  %95 = vmatpush.msra.mxu0 0.0
  %96 = vmatpush.msra.mxu0 %v56
  %97 = vmatmul.f32.gmra.mxu0 %v59
  %v98 = vpop.f32.mrf.mxu0
  %v99 = vadd.f32 0.0, %v98
  %100 = vdwg.mxu0
  %102 = vset.pattern.permute.xlu0 0
  %103 = vperm.xlu0 %102, %v79
  %v104 = vpop.permute.xlu0 %103
  %106 = vmatpush.msra.mxu0 %v49
  %107 = vmatpush.msra.mxu0 %v48
  %108 = vmatpush.msra.mxu0 %v47
  %109 = vmatpush.msra.mxu0 %v46
  %110 = vmatpush.msra.mxu0 %v45
  %111 = vmatpush.msra.mxu0 %v44
  %112 = vmatpush.msra.mxu0 %v43
  %113 = vmatpush.msra.mxu0 %v42
  %114 = vmatpush.msra.mxu0 %v41
  %115 = vmatpush.msra.mxu0 %v40
  %116 = vmatpush.msra.mxu0 %v39
  %117 = vmatpush.msra.mxu0 %v38
  %118 = vmatpush.msra.mxu0 %v37
  %119 = vmatpush.msra.mxu0 %v36
  %120 = vmatpush.msra.mxu0 %v35
  %121 = vmatpush.msra.mxu0 %v34
  %122 = vmatmul.f32.gmra.mxu0 %v51
  %v123 = vpop.f32.mrf.mxu0
  %v124 = vadd.f32 %v104, %v123
  %125 = vdwg.mxu0
  %v126 = vld [vmem:[#allocation2] sm:$0x1]
  %v128 = vperm.slane %v126, 0
  %129 = vset.pattern.permute.xlu0 0
  %130 = vperm.xlu0 %129, %v128
  %v131 = vpop.permute.xlu0 %130
  %v133 = vadd.f32 %v124, %v131
  %135 = vset.pattern.permute.xlu0 0
  %136 = vperm.xlu0 %135, %v99
  %v137 = vpop.permute.xlu0 %136
  %139 = vmatpush.msra.mxu0 %v49
  %140 = vmatpush.msra.mxu0 %v48
  %141 = vmatpush.msra.mxu0 %v47
  %142 = vmatpush.msra.mxu0 %v46
  %143 = vmatpush.msra.mxu0 %v45
  %144 = vmatpush.msra.mxu0 %v44
  %145 = vmatpush.msra.mxu0 %v43
  %146 = vmatpush.msra.mxu0 %v42
  %147 = vmatpush.msra.mxu0 %v41
  %148 = vmatpush.msra.mxu0 %v40
  %149 = vmatpush.msra.mxu0 %v39
  %150 = vmatpush.msra.mxu0 %v38
  %151 = vmatpush.msra.mxu0 %v37
  %152 = vmatpush.msra.mxu0 %v36
  %153 = vmatpush.msra.mxu0 %v35
  %154 = vmatpush.msra.mxu0 %v34
  %155 = vmatmul.f32.gmra.mxu0 %v52
  %v156 = vpop.f32.mrf.mxu0
  %v157 = vadd.f32 %v137, %v156
  %158 = vdwg.mxu0
  %v159 = vld [vmem:[#allocation3] sm:$0x1]
  %v161 = vperm.slane %v159, 0
  %162 = vset.pattern.permute.xlu0 0
  %163 = vperm.xlu0 %162, %v161
  %v164 = vpop.permute.xlu0 %163
  %v166 = vadd.f32 %v157, %v164
  %v167 = vrot.slane %v54, 4
  %v168 = vadd.f32 %v54, %v167
  %v169 = vrot.slane %v168, 2
  %v170 = vadd.f32 %v168, %v169
  %v171 = vrot.slane %v170, 1
  %v172 = vadd.f32 %v170, %v171
  %v173 = vadd.f32 %v126, %v172
  %vm174 = vcmask 0
  %175 = vst.msk [vmem:[#allocation2] sm:$0x1] %vm174, %v173
  %v176 = vld [vmem:[#allocation3] sm:$0x1]
  %v177 = vrot.slane %v56, 4
  %v178 = vadd.f32 %v56, %v177
  %v179 = vrot.slane %v178, 2
  %v180 = vadd.f32 %v178, %v179
  %v181 = vrot.slane %v180, 1
  %v182 = vadd.f32 %v180, %v181
  %v183 = vadd.f32 %v176, %v182
  %184 = vst.msk [vmem:[#allocation3] sm:$0x1] %vm174, %v183
  %v185 = vlaneseq
  %v186 = vshrl.u32 %v185, 7
  %v187 = vlaneseq
  %v188 = vand.u32 %v187, 127
  %s189 = smul.u32 0, 8
  %v190 = vstv %s189
  %v191 = vadd.s32 %v186, %v190
  %v192 = vmul.u32 %v191, 128
  %v193 = vadd.s32 %v192, %v188
  %vm194 = vcmp.lt.s32.totalorder %v193, 200
  %v195 = vld [vmem:[#allocation6] sm:$0x1]
  %v196 = vadd.s32 %v193, 1
  %v197 = vcvt.s32.f32 %v196
  %v198 = vsel %vm194, %v197, 1.0
  %v199 = vrcp.pop %v198
  %v200 = vmul.f32 %v198, %v199
  %v201 = vsub.f32 1.0, %v200
  %v202 = vmul.f32 %v199, %v201
  %v203 = vadd.f32 %v199, %v202
  %vm204 = vweird.f32 %v198
  %vm205 = vweird.f32 %v199
  %vm206 = vmor %vm204, %vm205
  %v207 = vsel %vm206, %v199, %v203
  %v208 = vand.u32 2147483647, %v198
  %vm209 = vcmp.eq.f32.partialorder %v208, 8.507059e+37
  %v210 = vand.u32 %v198, 2147483648
  %v211 = vor.u32 1.1754944e-38, %v210
  %v212 = vsel %vm209, %v211, %v207
  %v213 = vmul.f32 %v166, %v212
  %v214 = vsel %vm194, %v213, 0.0
  %v215 = vsub.f32 %v133, %v51
  %v216 = vsub.s32 200, %v193
  %v217 = vcvt.s32.f32 %v216
  %v218 = vsel %vm194, %v217, 1.0
  %v220 = vperm.slane %v195, 0
  %221 = vset.pattern.permute.xlu0 0
  %222 = vperm.xlu0 %221, %v220
  %v223 = vpop.permute.xlu0 %222
  %v225 = vsub.f32 %v223, %v215
  %v226 = vrcp.pop %v218
  %v227 = vmul.f32 %v218, %v226
  %v228 = vsub.f32 1.0, %v227
  %v229 = vmul.f32 %v226, %v228
  %v230 = vadd.f32 %v226, %v229
  %vm231 = vweird.f32 %v218
  %vm232 = vweird.f32 %v226
  %vm233 = vmor %vm231, %vm232
  %v234 = vsel %vm233, %v226, %v230
  %v235 = vand.u32 2147483647, %v218
  %vm236 = vcmp.eq.f32.partialorder %v235, 8.507059e+37
  %v237 = vand.u32 %v218, 2147483648
  %v238 = vor.u32 1.1754944e-38, %v237
  %v239 = vsel %vm236, %v238, %v234
  %v240 = vmul.f32 %v225, %v239
  %v241 = vsel %vm194, %v240, 0.0
  %242 = vst [vmem:[%s6] sm:$0xff] %v241
  %243 = vst [vmem:[%s7] sm:$0xff] %v214
  %v244 = vld [vmem:[#allocation4] sm:$0x1]
  %245 = vadd.xlane.f32.xlu0 %v241
  %v246 = vpop.xlane.xlu0 %245
  %v247 = vrot.slane %v246, 4
  %v248 = vadd.f32 %v246, %v247
  %v249 = vrot.slane %v248, 2
  %v250 = vadd.f32 %v248, %v249
  %v251 = vrot.slane %v250, 1
  %v252 = vadd.f32 %v250, %v251
  %v253 = vadd.f32 %v244, %v252
  %254 = vst.msk [vmem:[#allocation4] sm:$0x1] %vm174, %v253
  %v255 = vld [vmem:[#allocation5] sm:$0x1]
  %256 = vadd.xlane.f32.xlu0 %v214
  %v257 = vpop.xlane.xlu0 %256
  %v258 = vrot.slane %v257, 4
  %v259 = vadd.f32 %v257, %v258
  %v260 = vrot.slane %v259, 2
  %v261 = vadd.f32 %v259, %v260
  %v262 = vrot.slane %v261, 1
  %v263 = vadd.f32 %v261, %v262
  %v264 = vadd.f32 %v255, %v263
  %265 = vst.msk [vmem:[#allocation5] sm:$0x1] %vm174, %v264
  // Predicated region
  $region26: #{eaurc_forward.1} parent=0 // pred_check
    %p266 = pneg %p25
  $region27: #{eaurc_forward.1} parent=0 // pred_check_branch
    %268 = sbr.rel (%p266) target = $region29
  $region28: #{eaurc_forward.1} parent=0 // pred_region
    %v269 = vrcp.pop 200.0
    %v270 = vmul.f32 200.0, %v269
    %v271 = vsub.f32 1.0, %v270
    %v272 = vmul.f32 %v269, %v271
    %v273 = vadd.f32 %v269, %v272
    %vm274 = vweird.f32 %v269
    %v275 = vsel %vm274, %v269, %v273
    %v276 = vmul.f32 %v195, %v275
    %v277 = vld [vmem:[#allocation5] sm:$0x1]
    %v278 = vmul.f32 %v277, %v275
    %v279 = vld [vmem:[#allocation4] sm:$0x1]
    %v280 = vmul.f32 %v279, 2.0
    %v281 = vsub.f32 %v280, %v276
    %283 = vst [vmem:[#allocation1] sm:$0xff] %v241
    %s284 = scalar_lea.vmem [#allocation1], 1
    %v285 = vld [vmem:[%s284] ss:$9 sm:$0xff]
    %286 = vrot.lane.b32.xlu0 %v285, 57
    %v287 = vpop.permute.xlu0 %286
    %v289 = vsub.f32 %v281, %v287
    %v290 = vrcp.pop 400.0
    %v291 = vmul.f32 400.0, %v290
    %v292 = vsub.f32 1.0, %v291
    %v293 = vmul.f32 %v290, %v292
    %v294 = vadd.f32 %v290, %v293
    %vm295 = vweird.f32 %v290
    %v296 = vsel %vm295, %v290, %v294
    %v297 = vmul.f32 %v289, %v296
    %v298 = vsub.f32 %v297, %v278
    %vm299 = vcmp.eq.s32.totalorder %v188, 0
    %301 = vset.pattern.permute.xlu0 0
    %302 = vperm.xlu0 %301, %v298
    %v303 = vpop.permute.xlu0 %302
    %v305 = vperm.slane %v303, 0
    %v306 = vsel %vm299, %v305, 0.0
    %vm307 = vcmp.eq.s32.totalorder %v188, 1
    %309 = vset.pattern.permute.xlu0 0
    %310 = vperm.xlu0 %309, %v297
    %v311 = vpop.permute.xlu0 %310
    %v313 = vperm.slane %v311, 0
    %v314 = vsel %vm307, %v313, 0.0
    %v315 = vadd.f32 %v306, %v314
    %vm316 = vcmp.eq.s32.totalorder %v188, 2
    %318 = vset.pattern.permute.xlu0 0
    %319 = vperm.xlu0 %318, %v278
    %v320 = vpop.permute.xlu0 %319
    %v322 = vperm.slane %v320, 0
    %v323 = vsel %vm316, %v322, 0.0
    %v324 = vadd.f32 %v315, %v323
    %325 = vst [vmem:[%s5] sm:$0x1] %v324
  $region29: #{eaurc_forward.1} parent=0 // pred_fallthru
    _
  // Predicated region
  $region30: #{eaurc_forward.1} parent=0 // pred_check
    _
  $region31: #{eaurc_forward.1} parent=0 // pred_check_branch
    %327 = sbr.rel (0) target = $region33
  $region32: #{eaurc_forward.1} parent=0 // pred_region
    _
  $region33: #{eaurc_forward.1} parent=0 // pred_fallthru
    _
  // Predicated region
  $region34: #{eaurc_forward.1} parent=0 // pred_check
    _
  $region35: #{eaurc_forward.1} parent=0 // pred_check_branch
    %329 = sbr.rel (0) target = $region37
  $region36: #{eaurc_forward.1} parent=0 // pred_region
    _
  $region37: #{eaurc_forward.1} parent=0 // pred_fallthru
    _
  // Predicated region
  $region38: #{eaurc_forward.1} parent=0 // pred_check
    _
  $region39: #{eaurc_forward.1} parent=0 // pred_check_branch
    %331 = sbr.rel (0) target = $region41
  $region40: #{eaurc_forward.1} parent=0 // pred_region
    _
  $region41: #{eaurc_forward.1} parent=0 // pred_fallthru
    _
  // Predicated region
  $region42: #{eaurc_forward.1} parent=0 // pred_check
    _
  $region43: #{eaurc_forward.1} parent=0 // pred_check_branch
    %333 = sbr.rel (0) target = $region45
  $region44: #{eaurc_forward.1} parent=0 // pred_region
    _
  $region45: #{eaurc_forward.1} parent=0 // pred_fallthru
    _
  // Predicated region
  $region46: #{eaurc_forward.1} parent=0 // pred_check
    _
  $region47: #{eaurc_forward.1} parent=0 // pred_check_branch
    %335 = sbr.rel (0) target = $region49
  $region48: #{eaurc_forward.1} parent=0 // pred_region
    _
  $region49: #{eaurc_forward.1} parent=0 // pred_fallthru
    _
  // Predicated region
  $region50: #{eaurc_forward.1} parent=0 // pred_check
    _
  $region51: #{eaurc_forward.1} parent=0 // pred_check_branch
    %337 = sbr.rel (0) target = $region53
  $region52: #{eaurc_forward.1} parent=0 // pred_region
    _
  $region53: #{eaurc_forward.1} parent=0 // pred_fallthru
    _

// kernel: reverse
$region0: #{reverse}
  %s0 = inlined_call_operand.vmem [shape: f32[256], index: 0, kind: input, shape index: {}]
  %s1 = inlined_call_operand.vmem [shape: f32[256], index: 1, kind: output, shape index: {}]
  %v2 = vlaneseq
  %v3 = vsub.s32 127, %v2
  %4 = vset.pattern.permute.xlu0 %v3
  $region1: #{reverse} parent=0
    #allocation0 [shape = 'u8[8192]{0}', space=vmem, size = 0x2000, scoped, tag = 'operand span for operand 0']
    #allocation1 [shape = 'u8[2048]{0}', space=vmem, size = 0x800, scoped, tag = 'packed  for operand 0']
    #allocation2 [shape = 'u8[4096]{0}', space=vmem, size = 0x1000, scoped, tag = 'operand span for operand 1']
    #allocation3 [shape = 'u8[1024]{0}', space=vmem, size = 0x400, scoped, tag = 'packed  for operand 1']
    %s5 = scalar_lea.vmem [#allocation1], 2
    // Predicated region
    $region2: #{reverse} parent=1 // pred_check
      _
    $region3: #{reverse} parent=1 // pred_check_branch
      %7 = sbr.rel (0) target = $region5
    $region4: #{reverse} parent=1 // pred_region
      // Predicated region
      $region6: #{reverse} parent=4 // pred_check
        _
      $region7: #{reverse} parent=4 // pred_check_branch
        %9 = sbr.rel target = $region9
      $region8: #{reverse} parent=4 // pred_region
        // Predicated region
        $region21: #{reverse} parent=8 // pred_check
          _
        $region22: #{reverse} parent=8 // pred_check_branch
          %25 = sbr.rel (0) target = $region24
        $region23: #{reverse} parent=8 // pred_region
          %s27 = ssub.s32 4, 1
          loop: start=0, step=1, limit=1
          $region25: #{reverse} parent=23 // loop_pre_header
            _
          $region26: #{reverse} parent=23 // loop_header
            %s29 = sphi 0, %s33
            %p30 = scmp.ge.s32.totalorder %s29, 1
            %s34 = sphi %s0, %s0
            %s35 = sphi %s5, %s5
          $region27: #{reverse} parent=23 // loop_header_branch
            %32 = sbr.rel (%p30) target = $region31
          $region28: #{reverse} parent=23 // loop_body
            %v36 = vld [vmem:[%s34] sm:%s27]
            %37 = vst [vmem:[%s35] sm:%s27] %v36
          $region29: #{reverse} parent=23 // loop_footer
            %s33 = sadd.s32 1, %s29
          $region30: #{reverse} parent=23 // loop_footer_branch
            %28 = sbr.rel target = $region26
          $region31: #{reverse} parent=23 // loop_exit
            _
        $region24: #{reverse} parent=8 // pred_fallthru
          _
      $region9: #{reverse} parent=4 // pred_fallthru
        _
      // Predicated region
      $region10: #{reverse} parent=4 // pred_check
        _
      $region11: #{reverse} parent=4 // pred_check_branch
        %11 = sbr.rel (0) target = $region13
      $region12: #{reverse} parent=4 // pred_region
        %s13 = ssub.s32 4, 1
        loop: start=0, step=1, limit=1
        $region14: #{reverse} parent=12 // loop_pre_header
          _
        $region15: #{reverse} parent=12 // loop_header
          %s15 = sphi 0, %s19
          %p16 = scmp.ge.s32.totalorder %s15, 1
          %s20 = sphi %s0, %s0
          %s21 = sphi %s5, %s5
        $region16: #{reverse} parent=12 // loop_header_branch
          %18 = sbr.rel (%p16) target = $region20
        $region17: #{reverse} parent=12 // loop_body
          %v22 = vld [vmem:[%s20] sm:%s13]
          %23 = vst [vmem:[%s21] sm:%s13] %v22
        $region18: #{reverse} parent=12 // loop_footer
          %s19 = sadd.s32 1, %s15
        $region19: #{reverse} parent=12 // loop_footer_branch
          %14 = sbr.rel target = $region15
        $region20: #{reverse} parent=12 // loop_exit
          _
      $region13: #{reverse} parent=4 // pred_fallthru
        _
    $region5: #{reverse} parent=1 // pred_fallthru
      _
    %38 = vnop
    %s40 = ssub.s32 4, 1
    %s41 = scalar_lea.vmem [#allocation1], 2
    %v42 = vld [vmem:[%s41] sm:%s40]
    %s43 = scalar_lea.vmem [#allocation0], 8
    %44 = vst [vmem:[%s43] sm:%s40] %v42
    %v45 = vld [vmem:[#allocation1] sm:%s40]
    %46 = vst [vmem:[#allocation0] sm:%s40] %v45
    %s47 = scalar_lea.vmem [#allocation0], 7
    %v48 = vld [vmem:[%s47] ss:$-1 sm:$0xff]
    %v49 = vrot.slane %v48, 6
    %50 = vperm.xlu0 %4, %v49
    %v51 = vpop.permute.xlu0 %50
    %52 = vst [vmem:[#allocation2] sm:$0xff] %v51
    %s53 = scalar_lea.vmem [#allocation0], 8
    %s54 = scalar_lea.vmem %s53, 7 [#allocation0]
    %v55 = vld [vmem:[%s54] ss:$-1 sm:$0xff]
    %v56 = vrot.slane %v55, 6
    %57 = vperm.xlu0 %4, %v56
    %v58 = vpop.permute.xlu0 %57
    %v59 = vlaneseq
    %v60 = vshrl.u32 %v59, 7
    %vm61 = vcmp.lt.s32.totalorder %v60, 2
    %62 = vst.msk [vmem:[#allocation2] sm:$0xff] %vm61, %v58
    %s64 = ssub.s32 4, 1
    %v65 = vld [vmem:[#allocation2] sm:%s64]
    %s67 = ssub.s32 4, 1
    %68 = vst [vmem:[#allocation3] sm:%s67] %v65
    // Predicated region
    $region32: #{reverse} parent=1 // pred_check
      _
    $region33: #{reverse} parent=1 // pred_check_branch
      %70 = sbr.rel (0) target = $region35
    $region34: #{reverse} parent=1 // pred_region
      // Predicated region
      $region36: #{reverse} parent=34 // pred_check
        _
      $region37: #{reverse} parent=34 // pred_check_branch
        %72 = sbr.rel target = $region39
      $region38: #{reverse} parent=34 // pred_region
        // Predicated region
        $region51: #{reverse} parent=38 // pred_check
          _
        $region52: #{reverse} parent=38 // pred_check_branch
          %88 = sbr.rel (0) target = $region54
        $region53: #{reverse} parent=38 // pred_region
          %s90 = ssub.s32 4, 1
          loop: start=0, step=1, limit=1
          $region55: #{reverse} parent=53 // loop_pre_header
            _
          $region56: #{reverse} parent=53 // loop_header
            %s92 = sphi 0, %s96
            %p93 = scmp.ge.s32.totalorder %s92, 1
            %s97 = sphi [#allocation3], [#allocation3]
            %s98 = sphi %s1, %s1
          $region57: #{reverse} parent=53 // loop_header_branch
            %95 = sbr.rel (%p93) target = $region61
          $region58: #{reverse} parent=53 // loop_body
            %v99 = vld [vmem:[%s97] sm:%s90]
            %100 = vst [vmem:[%s98] sm:%s90] %v99
          $region59: #{reverse} parent=53 // loop_footer
            %s96 = sadd.s32 1, %s92
          $region60: #{reverse} parent=53 // loop_footer_branch
            %91 = sbr.rel target = $region56
          $region61: #{reverse} parent=53 // loop_exit
            _
        $region54: #{reverse} parent=38 // pred_fallthru
          _
      $region39: #{reverse} parent=34 // pred_fallthru
        _
      // Predicated region
      $region40: #{reverse} parent=34 // pred_check
        _
      $region41: #{reverse} parent=34 // pred_check_branch
        %74 = sbr.rel (0) target = $region43
      $region42: #{reverse} parent=34 // pred_region
        %s76 = ssub.s32 4, 1
        loop: start=0, step=1, limit=1
        $region44: #{reverse} parent=42 // loop_pre_header
          _
        $region45: #{reverse} parent=42 // loop_header
          %s78 = sphi 0, %s82
          %p79 = scmp.ge.s32.totalorder %s78, 1
          %s83 = sphi [#allocation3], [#allocation3]
          %s84 = sphi %s1, %s1
        $region46: #{reverse} parent=42 // loop_header_branch
          %81 = sbr.rel (%p79) target = $region50
        $region47: #{reverse} parent=42 // loop_body
          %v85 = vld [vmem:[%s83] sm:%s76]
          %86 = vst [vmem:[%s84] sm:%s76] %v85
        $region48: #{reverse} parent=42 // loop_footer
          %s82 = sadd.s32 1, %s78
        $region49: #{reverse} parent=42 // loop_footer_branch
          %77 = sbr.rel target = $region45
        $region50: #{reverse} parent=42 // loop_exit
          _
      $region43: #{reverse} parent=34 // pred_fallthru
        _
    $region35: #{reverse} parent=1 // pred_fallthru
      _
    %101 = vnop

// kernel: custom-call
$region0: #{custom-call}
  %s0 = inlined_call_operand.vmem [shape: u32[199], index: 0, kind: output, shape index: {}]

</llo_original>
